<compile_context>
chip_gen: v6e
topology: v6e:2x2x1
jax: 0.10.0
libtpu: 0.0.40
codegen_flags: <defaults>
</compile_context>

<pallas_src>
import functools

import jax
import jax.numpy as jnp
from jax import lax
from jax.experimental import pallas as pl
from jax.experimental.pallas import tpu as pltpu


def _round_up(v, m):
    return ((v + m - 1) // m) * m


def _fea_fused_kernel(x_ref, adj_ref, w1_ref, w2_ref, w3_ref, w4_ref,
                      o1_ref, o2_ref, o3_ref, o4_ref, *, inv_n):
    """Fully-unrolled 4-layer GNN encoder (single kernel invocation).

    x_ref  : (Np, D0p) bf16 padded input features (padded rows/cols are 0)
    adj_ref: (Np, Np)  bf16 padded adjacency      (padded rows/cols are 0)
    wi_ref : (D_{i-1}p, D_ip) bf16 per-layer padded weights
    oi_ref : (Np, D_ip) f32 per-layer outputs (true values in [:N, :true_dim])
    inv_n  : 1 / true node count -> BN statistics use the true N.
    """
    adj = adj_ref[...]                           # resident, loaded once

    def layer(feats_bf16, w_ref, o_ref):
        # support = features @ W   (bf16 operands, f32 accumulation on MXU)
        support = jnp.dot(feats_bf16, w_ref[...],
                          preferred_element_type=jnp.float32)
        # h = adj @ support        (bf16 operands, f32 accumulation)
        h = jnp.dot(adj, support.astype(jnp.bfloat16),
                    preferred_element_type=jnp.float32)

        # F.leaky_relu(h, 0.2) then F.elu(h): positive branch is the identity
        # through both; negative branch is exp(0.2*h) - 1.  min() keeps the
        # untaken positive-branch exp finite.
        h = jnp.where(h > 0, h, jnp.exp(0.2 * jnp.minimum(h, 0.0)) - 1.0)

        # BatchNorm1d(affine=False, track_running_stats=False): batch stats,
        # biased variance, eps=1e-5.  Padded rows of h are exactly zero
        # (adjacency padded rows are zero), so summing over Np rows and
        # dividing by the TRUE node count gives unbiased statistics.
        mean = jnp.sum(h, axis=0, keepdims=True) * inv_n
        var = jnp.maximum(
            jnp.sum(h * h, axis=0, keepdims=True) * inv_n - mean * mean, 0.0)
        h = (h - mean) * lax.rsqrt(var + 1e-5)

        o_ref[...] = h.astype(o_ref.dtype)       # lane-dense per-layer slab
        return h.astype(jnp.bfloat16)            # feeds the next layer

    h = layer(x_ref[...], w1_ref, o1_ref)
    h = layer(h, w2_ref, o2_ref)
    h = layer(h, w3_ref, o3_ref)
    layer(h, w4_ref, o4_ref)


def _vmem_capacity_bytes():
    """Physical per-core VMEM (128 MiB on v5e/v6e, 64 MiB on v7x)."""
    try:
        cap = getattr(pltpu.get_tpu_info(), "vmem_capacity_bytes", None)
        if cap:
            return int(cap)
    except Exception:
        pass
    try:
        kind = jax.devices()[0].device_kind.lower()
        if "v5" in kind or "v6" in kind:
            return 128 << 20
    except Exception:
        pass
    return 64 << 20                              # conservative (v7x per-TC)


@jax.jit
def fea_forward(x, fadj, w1, w2, w3, w4):
    """Fused 4-layer GNN encoder.  Returns (h1, h2, h3, h4) at their true
    feature widths (dropout p=0 / eval -> omitted)."""
    ws = (w1, w2, w3, w4)
    n = fadj.shape[0]
    n_pad = _round_up(n, 8)                      # sublane-aligned node count
    dims = [x.shape[1]] + [w.shape[1] for w in ws]
    dps = [_round_up(d, 128) for d in dims]      # per-layer lane-dense widths

    # Zero-pad: padded feature cols / adjacency rows+cols / weight rows+cols
    # contribute exact zeros, so real columns and BN stats are unaffected.
    x_p = jnp.zeros((n_pad, dps[0]), jnp.bfloat16).at[:n, : dims[0]].set(
        x.astype(jnp.bfloat16))
    adj_p = jnp.zeros((n_pad, n_pad), jnp.bfloat16).at[:n, :n].set(
        fadj.astype(jnp.bfloat16))
    w_ps = [
        jnp.zeros((dps[i], dps[i + 1]), jnp.bfloat16)
        .at[: ws[i].shape[0], : ws[i].shape[1]].set(ws[i].astype(jnp.bfloat16))
        for i in range(4)
    ]

    # VMEM budget: single-buffered whole-array blocks (grid-less call) plus
    # headroom for the compiler-managed intermediates.
    est = (n_pad * dps[0] * 2                       # x (bf16)
           + n_pad * n_pad * 2                      # adjacency (bf16)
           + sum(dps[i] * dps[i + 1] * 2 for i in range(4))   # weights (bf16)
           + sum(n_pad * dps[i + 1] * 4 for i in range(4))    # outputs (f32)
           + 3 * n_pad * max(dps) * 4)              # live h / support temps
    vmem_limit = int(min(_vmem_capacity_bytes(), max(2 * est, 32 << 20)))

    vmem_spec = pl.BlockSpec(memory_space=pltpu.MemorySpace.VMEM)
    outs = pl.pallas_call(
        functools.partial(_fea_fused_kernel, inv_n=1.0 / n),
        out_shape=tuple(
            jax.ShapeDtypeStruct((n_pad, dps[i + 1]), jnp.float32)
            for i in range(4)),
        in_specs=[vmem_spec] * 6,
        out_specs=tuple([vmem_spec] * 4),
        compiler_params=pltpu.CompilerParams(vmem_limit_bytes=vmem_limit),
    )(x_p, adj_p, *w_ps)

    return tuple(outs[i][:n, : dims[i + 1]] for i in range(4))


def xavier_uniform(key, fan_in, fan_out):
    # torch.nn.init.xavier_uniform_ default gain = 1.0
    a = (6.0 / (fan_in + fan_out)) ** 0.5
    return jax.random.uniform(
        key, (fan_in, fan_out), dtype=jnp.float32, minval=-a, maxval=a)


def init_fea_params(key, x_input, x_enc1, x_enc2, x_enc3, z_input):
    dims = [x_input, x_enc1, x_enc2, x_enc3, z_input]
    keys = jax.random.split(key, 4)
    return [xavier_uniform(keys[i], dims[i], dims[i + 1]) for i in range(4)]


def fea_reference(x, fadj, ws):
    """Pure-JAX reference with the same bf16-operand / f32-accumulate matmul
    precision as the kernel (apples-to-apples check)."""
    adj = fadj.astype(jnp.bfloat16)
    h = x.astype(jnp.float32)
    outs = []
    for w in ws:
        support = jnp.dot(h.astype(jnp.bfloat16), w.astype(jnp.bfloat16),
                          preferred_element_type=jnp.float32)
        hh = jnp.dot(adj, support.astype(jnp.bfloat16),
                     preferred_element_type=jnp.float32)
        hh = jnp.where(hh > 0, hh, 0.2 * hh)             # leaky_relu(0.2)
        hh = jnp.where(hh > 0, hh, jnp.exp(hh) - 1.0)    # elu
        mean = jnp.mean(hh, axis=0, keepdims=True)
        var = jnp.maximum(
            jnp.mean(hh * hh, axis=0, keepdims=True) - mean * mean, 0.0)
        h = (hh - mean) * lax.rsqrt(var + 1e-5)
        outs.append(h)
    return tuple(outs)


if __name__ == "__main__":
    # Small shapes consistent with the module:
    # N nodes, feature dims x_input -> x_enc1 -> x_enc2 -> x_enc3 -> z_input
    N = 8
    x_input, x_enc1, x_enc2, x_enc3, z_input = 32, 32, 16, 16, 8

    key = jax.random.PRNGKey(0)
    k_x, k_a, k_w = jax.random.split(key, 3)

    x = jax.random.normal(k_x, (N, x_input), dtype=jnp.float32)

    # deterministic dense "adjacency": row-normalized non-negative matrix
    a = jax.random.uniform(k_a, (N, N), dtype=jnp.float32)
    a = a + jnp.eye(N, dtype=jnp.float32)
    fadj = a / jnp.sum(a, axis=1, keepdims=True)

    w1, w2, w3, w4 = init_fea_params(
        k_w, x_input, x_enc1, x_enc2, x_enc3, z_input)

    outs = fea_forward(x, fadj, w1, w2, w3, w4)
    outs = jax.block_until_ready(outs)
    h1, h2, h3, h4 = outs

    assert h1.shape == (N, x_enc1)
    assert h2.shape == (N, x_enc2)
    assert h3.shape == (N, x_enc3)
    assert h4.shape == (N, z_input)
    assert all(bool(jnp.all(jnp.isfinite(h))) for h in outs)

    # Numerical sanity vs. a matching-precision pure-JAX reference
    # (outputs are batch-normalized, i.e. O(1)).
    refs = fea_reference(x, fadj, (w1, w2, w3, w4))
    for got, want in zip(outs, refs):
        assert float(jnp.max(jnp.abs(got - want))) < 1e-1

    print("KERNEL_OK")
</pallas_src>

<mosaic_0001>
module attributes {stable_mosaic.version = 11 : i64} {
  func.func @_fea_fused_kernel(%arg0: memref<8x128xbf16, #tpu.memory_space<vmem>>, %arg1: memref<8x8xbf16, #tpu.memory_space<vmem>>, %arg2: memref<128x128xbf16, #tpu.memory_space<vmem>>, %arg3: memref<128x128xbf16, #tpu.memory_space<vmem>>, %arg4: memref<128x128xbf16, #tpu.memory_space<vmem>>, %arg5: memref<128x128xbf16, #tpu.memory_space<vmem>>, %arg6: memref<8x128xf32, #tpu.memory_space<vmem>>, %arg7: memref<8x128xf32, #tpu.memory_space<vmem>>, %arg8: memref<8x128xf32, #tpu.memory_space<vmem>>, %arg9: memref<8x128xf32, #tpu.memory_space<vmem>>) attributes {dimension_semantics = [], scalar_prefetch = 0 : i64, scratch_operands = 0 : i64, tpu.core_type = #tpu.core_type<tc>} {
    %c0 = arith.constant 0 : index
    %c0_0 = arith.constant 0 : index
    %0 = vector.load %arg1[%c0, %c0_0] : memref<8x8xbf16, #tpu.memory_space<vmem>>, vector<8x8xbf16>
    %c0_1 = arith.constant 0 : index
    %c0_2 = arith.constant 0 : index
    %1 = vector.load %arg0[%c0_1, %c0_2] : memref<8x128xbf16, #tpu.memory_space<vmem>>, vector<8x128xbf16>
    %c0_3 = arith.constant 0 : index
    %c0_4 = arith.constant 0 : index
    %2 = vector.load %arg2[%c0_3, %c0_4] : memref<128x128xbf16, #tpu.memory_space<vmem>>, vector<128x128xbf16>
    %cst = arith.constant dense<0.000000e+00> : vector<8x128xf32>
    %3 = tpu.matmul %1, %2, %cst {dimension_numbers = #tpu.dot_dimension_numbers<[1], [0], [0], [1], [0, 0, 1, 1], [], []>} : vector<8x128xbf16>, vector<128x128xbf16>, vector<8x128xf32> -> vector<8x128xf32>
    %4 = arith.truncf %3 : vector<8x128xf32> to vector<8x128xbf16>
    %cst_5 = arith.constant dense<0.000000e+00> : vector<8x128xf32>
    %5 = tpu.matmul %0, %4, %cst_5 {dimension_numbers = #tpu.dot_dimension_numbers<[1], [0], [0], [1], [0, 0, 1, 1], [], []>} : vector<8x8xbf16>, vector<8x128xbf16>, vector<8x128xf32> -> vector<8x128xf32>
    %cst_6 = arith.constant 0.000000e+00 : f32
    %6 = vector.broadcast %cst_6 : f32 to vector<8x128xf32>
    %7 = arith.cmpf ogt, %5, %6 : vector<8x128xf32>
    %cst_7 = arith.constant 0.000000e+00 : f32
    %8 = vector.broadcast %cst_7 : f32 to vector<8x128xf32>
    %9 = arith.minimumf %5, %8 : vector<8x128xf32>
    %cst_8 = arith.constant 2.000000e-01 : f32
    %10 = vector.broadcast %cst_8 : f32 to vector<8x128xf32>
    %11 = arith.mulf %10, %9 : vector<8x128xf32>
    %12 = math.exp %11 : vector<8x128xf32>
    %cst_9 = arith.constant 1.000000e+00 : f32
    %13 = vector.broadcast %cst_9 : f32 to vector<8x128xf32>
    %14 = arith.subf %12, %13 : vector<8x128xf32>
    %15 = arith.select %7, %5, %14 : vector<8x128xi1>, vector<8x128xf32>
    %cst_10 = arith.constant dense<0.000000e+00> : vector<128xf32>
    %16 = vector.multi_reduction <add>, %15, %cst_10 [0] : vector<8x128xf32> to vector<128xf32>
    %17 = vector.shape_cast %16 : vector<128xf32> to vector<1x128xf32>
    %cst_11 = arith.constant 1.250000e-01 : f32
    %18 = vector.broadcast %cst_11 : f32 to vector<1x128xf32>
    %19 = arith.mulf %17, %18 : vector<1x128xf32>
    %20 = arith.mulf %15, %15 : vector<8x128xf32>
    %cst_12 = arith.constant dense<0.000000e+00> : vector<128xf32>
    %21 = vector.multi_reduction <add>, %20, %cst_12 [0] : vector<8x128xf32> to vector<128xf32>
    %22 = vector.shape_cast %21 : vector<128xf32> to vector<1x128xf32>
    %cst_13 = arith.constant 1.250000e-01 : f32
    %23 = vector.broadcast %cst_13 : f32 to vector<1x128xf32>
    %24 = arith.mulf %22, %23 : vector<1x128xf32>
    %25 = arith.mulf %19, %19 : vector<1x128xf32>
    %26 = arith.subf %24, %25 : vector<1x128xf32>
    %cst_14 = arith.constant 0.000000e+00 : f32
    %27 = vector.broadcast %cst_14 : f32 to vector<1x128xf32>
    %28 = arith.maximumf %26, %27 : vector<1x128xf32>
    %29 = vector.broadcast %19 : vector<1x128xf32> to vector<8x128xf32>
    %30 = arith.subf %15, %29 : vector<8x128xf32>
    %cst_15 = arith.constant 9.99999974E-6 : f32
    %31 = vector.broadcast %cst_15 : f32 to vector<1x128xf32>
    %32 = arith.addf %28, %31 : vector<1x128xf32>
    %33 = math.rsqrt %32 : vector<1x128xf32>
    %34 = vector.broadcast %33 : vector<1x128xf32> to vector<8x128xf32>
    %35 = arith.mulf %30, %34 : vector<8x128xf32>
    %c0_16 = arith.constant 0 : index
    %c0_17 = arith.constant 0 : index
    %36 = vector.load %arg6[%c0_16, %c0_17] : memref<8x128xf32, #tpu.memory_space<vmem>>, vector<8x128xf32>
    tpu.vector_store %arg6[%c0_16, %c0_17], %35 {strides = array<i32>} : memref<8x128xf32, #tpu.memory_space<vmem>>, vector<8x128xf32>,
    %37 = arith.truncf %35 : vector<8x128xf32> to vector<8x128xbf16>
    %c0_18 = arith.constant 0 : index
    %c0_19 = arith.constant 0 : index
    %38 = vector.load %arg3[%c0_18, %c0_19] : memref<128x128xbf16, #tpu.memory_space<vmem>>, vector<128x128xbf16>
    %cst_20 = arith.constant dense<0.000000e+00> : vector<8x128xf32>
    %39 = tpu.matmul %37, %38, %cst_20 {dimension_numbers = #tpu.dot_dimension_numbers<[1], [0], [0], [1], [0, 0, 1, 1], [], []>} : vector<8x128xbf16>, vector<128x128xbf16>, vector<8x128xf32> -> vector<8x128xf32>
    %40 = arith.truncf %39 : vector<8x128xf32> to vector<8x128xbf16>
    %cst_21 = arith.constant dense<0.000000e+00> : vector<8x128xf32>
    %41 = tpu.matmul %0, %40, %cst_21 {dimension_numbers = #tpu.dot_dimension_numbers<[1], [0], [0], [1], [0, 0, 1, 1], [], []>} : vector<8x8xbf16>, vector<8x128xbf16>, vector<8x128xf32> -> vector<8x128xf32>
    %cst_22 = arith.constant 0.000000e+00 : f32
    %42 = vector.broadcast %cst_22 : f32 to vector<8x128xf32>
    %43 = arith.cmpf ogt, %41, %42 : vector<8x128xf32>
    %cst_23 = arith.constant 0.000000e+00 : f32
    %44 = vector.broadcast %cst_23 : f32 to vector<8x128xf32>
    %45 = arith.minimumf %41, %44 : vector<8x128xf32>
    %cst_24 = arith.constant 2.000000e-01 : f32
    %46 = vector.broadcast %cst_24 : f32 to vector<8x128xf32>
    %47 = arith.mulf %46, %45 : vector<8x128xf32>
    %48 = math.exp %47 : vector<8x128xf32>
    %cst_25 = arith.constant 1.000000e+00 : f32
    %49 = vector.broadcast %cst_25 : f32 to vector<8x128xf32>
    %50 = arith.subf %48, %49 : vector<8x128xf32>
    %51 = arith.select %43, %41, %50 : vector<8x128xi1>, vector<8x128xf32>
    %cst_26 = arith.constant dense<0.000000e+00> : vector<128xf32>
    %52 = vector.multi_reduction <add>, %51, %cst_26 [0] : vector<8x128xf32> to vector<128xf32>
    %53 = vector.shape_cast %52 : vector<128xf32> to vector<1x128xf32>
    %cst_27 = arith.constant 1.250000e-01 : f32
    %54 = vector.broadcast %cst_27 : f32 to vector<1x128xf32>
    %55 = arith.mulf %53, %54 : vector<1x128xf32>
    %56 = arith.mulf %51, %51 : vector<8x128xf32>
    %cst_28 = arith.constant dense<0.000000e+00> : vector<128xf32>
    %57 = vector.multi_reduction <add>, %56, %cst_28 [0] : vector<8x128xf32> to vector<128xf32>
    %58 = vector.shape_cast %57 : vector<128xf32> to vector<1x128xf32>
    %cst_29 = arith.constant 1.250000e-01 : f32
    %59 = vector.broadcast %cst_29 : f32 to vector<1x128xf32>
    %60 = arith.mulf %58, %59 : vector<1x128xf32>
    %61 = arith.mulf %55, %55 : vector<1x128xf32>
    %62 = arith.subf %60, %61 : vector<1x128xf32>
    %cst_30 = arith.constant 0.000000e+00 : f32
    %63 = vector.broadcast %cst_30 : f32 to vector<1x128xf32>
    %64 = arith.maximumf %62, %63 : vector<1x128xf32>
    %65 = vector.broadcast %55 : vector<1x128xf32> to vector<8x128xf32>
    %66 = arith.subf %51, %65 : vector<8x128xf32>
    %cst_31 = arith.constant 9.99999974E-6 : f32
    %67 = vector.broadcast %cst_31 : f32 to vector<1x128xf32>
    %68 = arith.addf %64, %67 : vector<1x128xf32>
    %69 = math.rsqrt %68 : vector<1x128xf32>
    %70 = vector.broadcast %69 : vector<1x128xf32> to vector<8x128xf32>
    %71 = arith.mulf %66, %70 : vector<8x128xf32>
    %c0_32 = arith.constant 0 : index
    %c0_33 = arith.constant 0 : index
    %72 = vector.load %arg7[%c0_32, %c0_33] : memref<8x128xf32, #tpu.memory_space<vmem>>, vector<8x128xf32>
    tpu.vector_store %arg7[%c0_32, %c0_33], %71 {strides = array<i32>} : memref<8x128xf32, #tpu.memory_space<vmem>>, vector<8x128xf32>,
    %73 = arith.truncf %71 : vector<8x128xf32> to vector<8x128xbf16>
    %c0_34 = arith.constant 0 : index
    %c0_35 = arith.constant 0 : index
    %74 = vector.load %arg4[%c0_34, %c0_35] : memref<128x128xbf16, #tpu.memory_space<vmem>>, vector<128x128xbf16>
    %cst_36 = arith.constant dense<0.000000e+00> : vector<8x128xf32>
    %75 = tpu.matmul %73, %74, %cst_36 {dimension_numbers = #tpu.dot_dimension_numbers<[1], [0], [0], [1], [0, 0, 1, 1], [], []>} : vector<8x128xbf16>, vector<128x128xbf16>, vector<8x128xf32> -> vector<8x128xf32>
    %76 = arith.truncf %75 : vector<8x128xf32> to vector<8x128xbf16>
    %cst_37 = arith.constant dense<0.000000e+00> : vector<8x128xf32>
    %77 = tpu.matmul %0, %76, %cst_37 {dimension_numbers = #tpu.dot_dimension_numbers<[1], [0], [0], [1], [0, 0, 1, 1], [], []>} : vector<8x8xbf16>, vector<8x128xbf16>, vector<8x128xf32> -> vector<8x128xf32>
    %cst_38 = arith.constant 0.000000e+00 : f32
    %78 = vector.broadcast %cst_38 : f32 to vector<8x128xf32>
    %79 = arith.cmpf ogt, %77, %78 : vector<8x128xf32>
    %cst_39 = arith.constant 0.000000e+00 : f32
    %80 = vector.broadcast %cst_39 : f32 to vector<8x128xf32>
    %81 = arith.minimumf %77, %80 : vector<8x128xf32>
    %cst_40 = arith.constant 2.000000e-01 : f32
    %82 = vector.broadcast %cst_40 : f32 to vector<8x128xf32>
    %83 = arith.mulf %82, %81 : vector<8x128xf32>
    %84 = math.exp %83 : vector<8x128xf32>
    %cst_41 = arith.constant 1.000000e+00 : f32
    %85 = vector.broadcast %cst_41 : f32 to vector<8x128xf32>
    %86 = arith.subf %84, %85 : vector<8x128xf32>
    %87 = arith.select %79, %77, %86 : vector<8x128xi1>, vector<8x128xf32>
    %cst_42 = arith.constant dense<0.000000e+00> : vector<128xf32>
    %88 = vector.multi_reduction <add>, %87, %cst_42 [0] : vector<8x128xf32> to vector<128xf32>
    %89 = vector.shape_cast %88 : vector<128xf32> to vector<1x128xf32>
    %cst_43 = arith.constant 1.250000e-01 : f32
    %90 = vector.broadcast %cst_43 : f32 to vector<1x128xf32>
    %91 = arith.mulf %89, %90 : vector<1x128xf32>
    %92 = arith.mulf %87, %87 : vector<8x128xf32>
    %cst_44 = arith.constant dense<0.000000e+00> : vector<128xf32>
    %93 = vector.multi_reduction <add>, %92, %cst_44 [0] : vector<8x128xf32> to vector<128xf32>
    %94 = vector.shape_cast %93 : vector<128xf32> to vector<1x128xf32>
    %cst_45 = arith.constant 1.250000e-01 : f32
    %95 = vector.broadcast %cst_45 : f32 to vector<1x128xf32>
    %96 = arith.mulf %94, %95 : vector<1x128xf32>
    %97 = arith.mulf %91, %91 : vector<1x128xf32>
    %98 = arith.subf %96, %97 : vector<1x128xf32>
    %cst_46 = arith.constant 0.000000e+00 : f32
    %99 = vector.broadcast %cst_46 : f32 to vector<1x128xf32>
    %100 = arith.maximumf %98, %99 : vector<1x128xf32>
    %101 = vector.broadcast %91 : vector<1x128xf32> to vector<8x128xf32>
    %102 = arith.subf %87, %101 : vector<8x128xf32>
    %cst_47 = arith.constant 9.99999974E-6 : f32
    %103 = vector.broadcast %cst_47 : f32 to vector<1x128xf32>
    %104 = arith.addf %100, %103 : vector<1x128xf32>
    %105 = math.rsqrt %104 : vector<1x128xf32>
    %106 = vector.broadcast %105 : vector<1x128xf32> to vector<8x128xf32>
    %107 = arith.mulf %102, %106 : vector<8x128xf32>
    %c0_48 = arith.constant 0 : index
    %c0_49 = arith.constant 0 : index
    %108 = vector.load %arg8[%c0_48, %c0_49] : memref<8x128xf32, #tpu.memory_space<vmem>>, vector<8x128xf32>
    tpu.vector_store %arg8[%c0_48, %c0_49], %107 {strides = array<i32>} : memref<8x128xf32, #tpu.memory_space<vmem>>, vector<8x128xf32>,
    %109 = arith.truncf %107 : vector<8x128xf32> to vector<8x128xbf16>
    %c0_50 = arith.constant 0 : index
    %c0_51 = arith.constant 0 : index
    %110 = vector.load %arg5[%c0_50, %c0_51] : memref<128x128xbf16, #tpu.memory_space<vmem>>, vector<128x128xbf16>
    %cst_52 = arith.constant dense<0.000000e+00> : vector<8x128xf32>
    %111 = tpu.matmul %109, %110, %cst_52 {dimension_numbers = #tpu.dot_dimension_numbers<[1], [0], [0], [1], [0, 0, 1, 1], [], []>} : vector<8x128xbf16>, vector<128x128xbf16>, vector<8x128xf32> -> vector<8x128xf32>
    %112 = arith.truncf %111 : vector<8x128xf32> to vector<8x128xbf16>
    %cst_53 = arith.constant dense<0.000000e+00> : vector<8x128xf32>
    %113 = tpu.matmul %0, %112, %cst_53 {dimension_numbers = #tpu.dot_dimension_numbers<[1], [0], [0], [1], [0, 0, 1, 1], [], []>} : vector<8x8xbf16>, vector<8x128xbf16>, vector<8x128xf32> -> vector<8x128xf32>
    %cst_54 = arith.constant 0.000000e+00 : f32
    %114 = vector.broadcast %cst_54 : f32 to vector<8x128xf32>
    %115 = arith.cmpf ogt, %113, %114 : vector<8x128xf32>
    %cst_55 = arith.constant 0.000000e+00 : f32
    %116 = vector.broadcast %cst_55 : f32 to vector<8x128xf32>
    %117 = arith.minimumf %113, %116 : vector<8x128xf32>
    %cst_56 = arith.constant 2.000000e-01 : f32
    %118 = vector.broadcast %cst_56 : f32 to vector<8x128xf32>
    %119 = arith.mulf %118, %117 : vector<8x128xf32>
    %120 = math.exp %119 : vector<8x128xf32>
    %cst_57 = arith.constant 1.000000e+00 : f32
    %121 = vector.broadcast %cst_57 : f32 to vector<8x128xf32>
    %122 = arith.subf %120, %121 : vector<8x128xf32>
    %123 = arith.select %115, %113, %122 : vector<8x128xi1>, vector<8x128xf32>
    %cst_58 = arith.constant dense<0.000000e+00> : vector<128xf32>
    %124 = vector.multi_reduction <add>, %123, %cst_58 [0] : vector<8x128xf32> to vector<128xf32>
    %125 = vector.shape_cast %124 : vector<128xf32> to vector<1x128xf32>
    %cst_59 = arith.constant 1.250000e-01 : f32
    %126 = vector.broadcast %cst_59 : f32 to vector<1x128xf32>
    %127 = arith.mulf %125, %126 : vector<1x128xf32>
    %128 = arith.mulf %123, %123 : vector<8x128xf32>
    %cst_60 = arith.constant dense<0.000000e+00> : vector<128xf32>
    %129 = vector.multi_reduction <add>, %128, %cst_60 [0] : vector<8x128xf32> to vector<128xf32>
    %130 = vector.shape_cast %129 : vector<128xf32> to vector<1x128xf32>
    %cst_61 = arith.constant 1.250000e-01 : f32
    %131 = vector.broadcast %cst_61 : f32 to vector<1x128xf32>
    %132 = arith.mulf %130, %131 : vector<1x128xf32>
    %133 = arith.mulf %127, %127 : vector<1x128xf32>
    %134 = arith.subf %132, %133 : vector<1x128xf32>
    %cst_62 = arith.constant 0.000000e+00 : f32
    %135 = vector.broadcast %cst_62 : f32 to vector<1x128xf32>
    %136 = arith.maximumf %134, %135 : vector<1x128xf32>
    %137 = vector.broadcast %127 : vector<1x128xf32> to vector<8x128xf32>
    %138 = arith.subf %123, %137 : vector<8x128xf32>
    %cst_63 = arith.constant 9.99999974E-6 : f32
    %139 = vector.broadcast %cst_63 : f32 to vector<1x128xf32>
    %140 = arith.addf %136, %139 : vector<1x128xf32>
    %141 = math.rsqrt %140 : vector<1x128xf32>
    %142 = vector.broadcast %141 : vector<1x128xf32> to vector<8x128xf32>
    %143 = arith.mulf %138, %142 : vector<8x128xf32>
    %c0_64 = arith.constant 0 : index
    %c0_65 = arith.constant 0 : index
    %144 = vector.load %arg9[%c0_64, %c0_65] : memref<8x128xf32, #tpu.memory_space<vmem>>, vector<8x128xf32>
    tpu.vector_store %arg9[%c0_64, %c0_65], %143 {strides = array<i32>} : memref<8x128xf32, #tpu.memory_space<vmem>>, vector<8x128xf32>,
    return
  }
}

</mosaic_0001>

<llo_original>
// kernel: fea_forward.1
$region0: #{fea_forward.1}
  #allocation0 [shape = 'u32[]', space=smem, size = 0x4, offset = 0x4, fixed_abs, tag = 'smem constant byte address 0x4 - core index']
  #allocation1 [shape = 'u32[144,128]{1,0:T(1,128)}', space=vmem, size = 0x12000, scoped, tag = 'internal scratch']
  %s0 = inlined_call_operand.vmem [shape: bf16[8,128], index: 0, kind: input, shape index: {}]
  %s1 = inlined_call_operand.vmem [shape: bf16[8,8], index: 1, kind: input, shape index: {}]
  %s2 = inlined_call_operand.vmem [shape: bf16[128,128], index: 2, kind: input, shape index: {}]
  %s3 = inlined_call_operand.vmem [shape: bf16[128,128], index: 3, kind: input, shape index: {}]
  %s4 = inlined_call_operand.vmem [shape: bf16[128,128], index: 4, kind: input, shape index: {}]
  %s5 = inlined_call_operand.vmem [shape: bf16[128,128], index: 5, kind: input, shape index: {}]
  %s6 = inlined_call_operand.hbm [shape: f32[8,128], index: 6, kind: output, shape index: {0}]
  %s7 = inlined_call_operand.hbm [shape: f32[8,128], index: 7, kind: output, shape index: {1}]
  %s8 = inlined_call_operand.hbm [shape: f32[8,128], index: 8, kind: output, shape index: {2}]
  %s9 = inlined_call_operand.hbm [shape: f32[8,128], index: 9, kind: output, shape index: {3}]
  %10 = xla_tuple %s6, %s7, %s8, %s9
  %s11 = sld [smem:[#allocation0]]
  $region58: #{fea_forward.1} parent=0
    _
  %s13 = ssub.s32 1, %s11
  %s14 = scalar_select 0, %s13, %s11
  $region1: #{fea_forward.1} parent=0
    #allocation2 [shape = 'u8[4096]{0}', space=vmem, size = 0x1000, scoped, tag = 'output window, operand 0, single buffered']
    #allocation3 [shape = 's32[1]{0}', space=sflag, size = 0x4, scoped, tag = 'scoped memory for fea_forward.1']
    #allocation4 [shape = 'u8[4096]{0}', space=vmem, size = 0x1000, scoped, tag = 'output window, operand 1, single buffered']
    #allocation5 [shape = 's32[1]{0}', space=sflag, size = 0x4, scoped, tag = 'scoped memory for fea_forward.1']
    #allocation6 [shape = 'u8[4096]{0}', space=vmem, size = 0x1000, scoped, tag = 'output window, operand 2, single buffered']
    #allocation7 [shape = 'u8[4096]{0}', space=vmem, size = 0x1000, scoped, tag = 'output window, operand 3, single buffered']
    #allocation8 [shape = 's32[1]{0}', space=sflag, size = 0x4, scoped, tag = 'scoped memory for fea_forward.1']
    %15 = vsyncpa [#allocation3], 0
    %16 = vsyncpa [#allocation5], 0
    %17 = vsyncpa [#allocation8], 0
    // Predicated region
    $region2: #{fea_forward.1} parent=1 // pred_check
      _
    $region3: #{fea_forward.1} parent=1 // pred_check_branch
      %19 = sbr.rel (0) target = $region5
    $region4: #{fea_forward.1} parent=1 // pred_region
      _
    $region5: #{fea_forward.1} parent=1 // pred_fallthru
      _
    // Predicated region
    $region6: #{fea_forward.1} parent=1 // pred_check
      _
    $region7: #{fea_forward.1} parent=1 // pred_check_branch
      %21 = sbr.rel (0) target = $region9
    $region8: #{fea_forward.1} parent=1 // pred_region
      _
    $region9: #{fea_forward.1} parent=1 // pred_fallthru
      _
    // Predicated region
    $region10: #{fea_forward.1} parent=1 // pred_check
      _
    $region11: #{fea_forward.1} parent=1 // pred_check_branch
      %23 = sbr.rel (0) target = $region13
    $region12: #{fea_forward.1} parent=1 // pred_region
      _
    $region13: #{fea_forward.1} parent=1 // pred_fallthru
      _
    // Predicated region
    $region14: #{fea_forward.1} parent=1 // pred_check
      _
    $region15: #{fea_forward.1} parent=1 // pred_check_branch
      %25 = sbr.rel (0) target = $region17
    $region16: #{fea_forward.1} parent=1 // pred_region
      _
    $region17: #{fea_forward.1} parent=1 // pred_fallthru
      _
    // Predicated region
    $region18: #{fea_forward.1} parent=1 // pred_check
      _
    $region19: #{fea_forward.1} parent=1 // pred_check_branch
      %27 = sbr.rel (0) target = $region21
    $region20: #{fea_forward.1} parent=1 // pred_region
      _
    $region21: #{fea_forward.1} parent=1 // pred_fallthru
      _
    // Predicated region
    $region22: #{fea_forward.1} parent=1 // pred_check
      _
    $region23: #{fea_forward.1} parent=1 // pred_check_branch
      %29 = sbr.rel (0) target = $region25
    $region24: #{fea_forward.1} parent=1 // pred_region
      _
    $region25: #{fea_forward.1} parent=1 // pred_fallthru
      _
    %v31 = vld [vmem:[%s1] sm:$0xf]
    %v32 = vld [vmem:[%s0] sm:$0xf]
    %v33 = vld [vmem:[%s2] sm:$0xf]
    %v34 = vld [vmem:[%s2 + $0x4] sm:$0xf]
    %v35 = vld [vmem:[%s2 + $0x8] sm:$0xf]
    %v36 = vld [vmem:[%s2 + $0xc] sm:$0xf]
    %v37 = vld [vmem:[%s2 + $0x10] sm:$0xf]
    %v38 = vld [vmem:[%s2 + $0x14] sm:$0xf]
    %v39 = vld [vmem:[%s2 + $0x18] sm:$0xf]
    %v40 = vld [vmem:[%s2 + $0x1c] sm:$0xf]
    %v41 = vld [vmem:[%s2 + $0x20] sm:$0xf]
    %v42 = vld [vmem:[%s2 + $0x24] sm:$0xf]
    %v43 = vld [vmem:[%s2 + $0x28] sm:$0xf]
    %v44 = vld [vmem:[%s2 + $0x2c] sm:$0xf]
    %v45 = vld [vmem:[%s2 + $0x30] sm:$0xf]
    %v46 = vld [vmem:[%s2 + $0x34] sm:$0xf]
    %v47 = vld [vmem:[%s2 + $0x38] sm:$0xf]
    %v48 = vld [vmem:[%s2 + $0x3c] sm:$0xf]
    %v65 = vunpack.c.l.b16 %v33
    %v66 = vunpack.c.l.b16 %v34
    %v67 = vunpack.c.l.b16 %v35
    %v68 = vunpack.c.l.b16 %v36
    %v69 = vunpack.c.l.b16 %v37
    %v70 = vunpack.c.l.b16 %v38
    %v71 = vunpack.c.l.b16 %v39
    %v72 = vunpack.c.l.b16 %v40
    %v73 = vunpack.c.l.b16 %v41
    %v74 = vunpack.c.l.b16 %v42
    %v75 = vunpack.c.l.b16 %v43
    %v76 = vunpack.c.l.b16 %v44
    %v77 = vunpack.c.l.b16 %v45
    %v78 = vunpack.c.l.b16 %v46
    %v79 = vunpack.c.l.b16 %v47
    %v80 = vunpack.c.l.b16 %v48
    %v81 = vpack.c.b16 %v66, %v65
    %v82 = vpack.c.b16 %v68, %v67
    %v83 = vpack.c.b16 %v70, %v69
    %v84 = vpack.c.b16 %v72, %v71
    %v85 = vpack.c.b16 %v74, %v73
    %v86 = vpack.c.b16 %v76, %v75
    %v87 = vpack.c.b16 %v78, %v77
    %v88 = vpack.c.b16 %v80, %v79
    %97 = vmatprep.subr.bf16.mxu0 0
    %98 = vmatpush1.bf16.msra.mxu0 %v88
    %99 = vmatprep.subr.bf16.mxu0 0
    %100 = vmatpush1.bf16.msra.mxu0 %v87
    %101 = vmatprep.subr.bf16.mxu0 0
    %102 = vmatpush1.bf16.msra.mxu0 %v86
    %103 = vmatprep.subr.bf16.mxu0 0
    %104 = vmatpush1.bf16.msra.mxu0 %v85
    %105 = vmatprep.subr.bf16.mxu0 0
    %106 = vmatpush1.bf16.msra.mxu0 %v84
    %107 = vmatprep.subr.bf16.mxu0 0
    %108 = vmatpush1.bf16.msra.mxu0 %v83
    %109 = vmatprep.subr.bf16.mxu0 0
    %110 = vmatpush1.bf16.msra.mxu0 %v82
    %111 = vmatprep.subr.bf16.mxu0 0
    %112 = vmatpush1.bf16.msra.mxu0 %v81
    %113 = vmatprep.subr.bf16.mxu0 0
    %114 = vmatpush2.bf16.msra.mxu0 0
    %115 = vmatprep.subr.bf16.mxu0 0
    %116 = vmatpush2.bf16.msra.mxu0 0
    %117 = vmatprep.subr.bf16.mxu0 0
    %118 = vmatpush2.bf16.msra.mxu0 0
    %119 = vmatprep.subr.bf16.mxu0 0
    %120 = vmatpush2.bf16.msra.mxu0 0
    %121 = vmatprep.subr.bf16.mxu0 0
    %122 = vmatpush2.bf16.msra.mxu0 0
    %123 = vmatprep.subr.bf16.mxu0 0
    %124 = vmatpush2.bf16.msra.mxu0 0
    %125 = vmatprep.subr.bf16.mxu0 0
    %126 = vmatpush2.bf16.msra.mxu0 0
    %127 = vmatprep.subr.bf16.mxu0 0
    %128 = vmatpush2.bf16.msra.mxu0 0
    %129 = vmatprep.mubr.bf16.mxu0 0
    %130 = vmatmul.mubr.bf16.gmra.mxu0 %v32
    %v131 = vpop.f32.mrf.mxu0
    %v132 = vadd.f32 0.0, %v131
    %v133 = vpop.f32.mrf.mxu0
    %v134 = vpop.f32.mrf.mxu0
    %v135 = vpop.f32.mrf.mxu0
    %136 = vdwg.mxu0
    %v137 = vpack.c.bf16 %v132, %v132
    %vm138 = vcmask 64512
    %v140 = vsel %vm138, %v31, 0
    %vm142 = vcmask 1043456
    %v144 = vsel %vm142, %v137, 0
    %146 = vmatprep.subr.bf16.mxu0 0
    %147 = vmatpush1.bf16.msra.mxu0 0
    %148 = vmatprep.subr.bf16.mxu0 0
    %149 = vmatpush1.bf16.msra.mxu0 0
    %150 = vmatprep.subr.bf16.mxu0 0
    %151 = vmatpush1.bf16.msra.mxu0 0
    %152 = vmatprep.subr.bf16.mxu0 0
    %153 = vmatpush1.bf16.msra.mxu0 0
    %154 = vmatprep.subr.bf16.mxu0 0
    %155 = vmatpush1.bf16.msra.mxu0 0
    %156 = vmatprep.subr.bf16.mxu0 0
    %157 = vmatpush1.bf16.msra.mxu0 0
    %158 = vmatprep.subr.bf16.mxu0 0
    %159 = vmatpush1.bf16.msra.mxu0 0
    %160 = vmatprep.subr.bf16.mxu0 0
    %161 = vmatpush1.bf16.msra.mxu0 %v144
    %162 = vmatprep.subr.bf16.mxu0 0
    %163 = vmatpush2.bf16.msra.mxu0 0
    %164 = vmatprep.subr.bf16.mxu0 0
    %165 = vmatpush2.bf16.msra.mxu0 0
    %166 = vmatprep.subr.bf16.mxu0 0
    %167 = vmatpush2.bf16.msra.mxu0 0
    %168 = vmatprep.subr.bf16.mxu0 0
    %169 = vmatpush2.bf16.msra.mxu0 0
    %170 = vmatprep.subr.bf16.mxu0 0
    %171 = vmatpush2.bf16.msra.mxu0 0
    %172 = vmatprep.subr.bf16.mxu0 0
    %173 = vmatpush2.bf16.msra.mxu0 0
    %174 = vmatprep.subr.bf16.mxu0 0
    %175 = vmatpush2.bf16.msra.mxu0 0
    %176 = vmatprep.subr.bf16.mxu0 0
    %177 = vmatpush2.bf16.msra.mxu0 0
    %178 = vmatprep.mubr.bf16.mxu0 0
    %179 = vmatmul.mubr.bf16.gmra.mxu0 %v140
    %v180 = vpop.f32.mrf.mxu0
    %v181 = vadd.f32 0.0, %v180
    %v182 = vpop.f32.mrf.mxu0
    %v183 = vpop.f32.mrf.mxu0
    %v184 = vpop.f32.mrf.mxu0
    %185 = vdwg.mxu0
    %vm186 = vcmp.gt.f32.partialorder %v181, 0.0
    %v187 = vmin.f32 %v181, 0.0
    %v188 = vmul.f32 %v187, 0.2
    %v189 = vmul.f32 %v188, 1.442695
    %v190 = vpow.pop %v189
    %v191 = vsub.f32 %v190, 1.0
    %v192 = vsel %vm186, %v181, %v191
    %v193 = vrot.slane %v192, 4
    %v194 = vadd.f32 %v192, %v193
    %v195 = vrot.slane %v194, 2
    %v196 = vadd.f32 %v194, %v195
    %v197 = vrot.slane %v196, 1
    %v198 = vadd.f32 %v196, %v197
    %v199 = vmul.f32 %v198, 0.125
    %v200 = vmul.f32 %v192, %v192
    %v201 = vrot.slane %v200, 4
    %v202 = vadd.f32 %v200, %v201
    %v203 = vrot.slane %v202, 2
    %v204 = vadd.f32 %v202, %v203
    %v205 = vrot.slane %v204, 1
    %v206 = vadd.f32 %v204, %v205
    %v207 = vmul.f32 %v206, 0.125
    %v208 = vmul.f32 %v199, %v199
    %v209 = vsub.f32 %v207, %v208
    %v210 = vmax.f32 %v209, 0.0
    %v211 = vsub.f32 %v192, %v199
    %v212 = vadd.f32 %v210, 1e-05
    %v213 = vrsqrt.pop %v212
    %v214 = vmul.f32 %v211, %v213
    %215 = vst [vmem:[#allocation2] sm:$0xff] %v214
    %v216 = vpack.c.bf16 %v214, %v214
    %v217 = vld [vmem:[%s3] sm:$0xf]
    %v218 = vld [vmem:[%s3 + $0x4] sm:$0xf]
    %v219 = vld [vmem:[%s3 + $0x8] sm:$0xf]
    %v220 = vld [vmem:[%s3 + $0xc] sm:$0xf]
    %v221 = vld [vmem:[%s3 + $0x10] sm:$0xf]
    %v222 = vld [vmem:[%s3 + $0x14] sm:$0xf]
    %v223 = vld [vmem:[%s3 + $0x18] sm:$0xf]
    %v224 = vld [vmem:[%s3 + $0x1c] sm:$0xf]
    %v225 = vld [vmem:[%s3 + $0x20] sm:$0xf]
    %v226 = vld [vmem:[%s3 + $0x24] sm:$0xf]
    %v227 = vld [vmem:[%s3 + $0x28] sm:$0xf]
    %v228 = vld [vmem:[%s3 + $0x2c] sm:$0xf]
    %v229 = vld [vmem:[%s3 + $0x30] sm:$0xf]
    %v230 = vld [vmem:[%s3 + $0x34] sm:$0xf]
    %v231 = vld [vmem:[%s3 + $0x38] sm:$0xf]
    %v232 = vld [vmem:[%s3 + $0x3c] sm:$0xf]
    %v249 = vunpack.c.l.b16 %v217
    %v250 = vunpack.c.l.b16 %v218
    %v251 = vunpack.c.l.b16 %v219
    %v252 = vunpack.c.l.b16 %v220
    %v253 = vunpack.c.l.b16 %v221
    %v254 = vunpack.c.l.b16 %v222
    %v255 = vunpack.c.l.b16 %v223
    %v256 = vunpack.c.l.b16 %v224
    %v257 = vunpack.c.l.b16 %v225
    %v258 = vunpack.c.l.b16 %v226
    %v259 = vunpack.c.l.b16 %v227
    %v260 = vunpack.c.l.b16 %v228
    %v261 = vunpack.c.l.b16 %v229
    %v262 = vunpack.c.l.b16 %v230
    %v263 = vunpack.c.l.b16 %v231
    %v264 = vunpack.c.l.b16 %v232
    %v265 = vpack.c.b16 %v250, %v249
    %v266 = vpack.c.b16 %v252, %v251
    %v267 = vpack.c.b16 %v254, %v253
    %v268 = vpack.c.b16 %v256, %v255
    %v269 = vpack.c.b16 %v258, %v257
    %v270 = vpack.c.b16 %v260, %v259
    %v271 = vpack.c.b16 %v262, %v261
    %v272 = vpack.c.b16 %v264, %v263
    %281 = vmatprep.subr.bf16.mxu0 0
    %282 = vmatpush1.bf16.msra.mxu0 %v272
    %283 = vmatprep.subr.bf16.mxu0 0
    %284 = vmatpush1.bf16.msra.mxu0 %v271
    %285 = vmatprep.subr.bf16.mxu0 0
    %286 = vmatpush1.bf16.msra.mxu0 %v270
    %287 = vmatprep.subr.bf16.mxu0 0
    %288 = vmatpush1.bf16.msra.mxu0 %v269
    %289 = vmatprep.subr.bf16.mxu0 0
    %290 = vmatpush1.bf16.msra.mxu0 %v268
    %291 = vmatprep.subr.bf16.mxu0 0
    %292 = vmatpush1.bf16.msra.mxu0 %v267
    %293 = vmatprep.subr.bf16.mxu0 0
    %294 = vmatpush1.bf16.msra.mxu0 %v266
    %295 = vmatprep.subr.bf16.mxu0 0
    %296 = vmatpush1.bf16.msra.mxu0 %v265
    %297 = vmatprep.subr.bf16.mxu0 0
    %298 = vmatpush2.bf16.msra.mxu0 0
    %299 = vmatprep.subr.bf16.mxu0 0
    %300 = vmatpush2.bf16.msra.mxu0 0
    %301 = vmatprep.subr.bf16.mxu0 0
    %302 = vmatpush2.bf16.msra.mxu0 0
    %303 = vmatprep.subr.bf16.mxu0 0
    %304 = vmatpush2.bf16.msra.mxu0 0
    %305 = vmatprep.subr.bf16.mxu0 0
    %306 = vmatpush2.bf16.msra.mxu0 0
    %307 = vmatprep.subr.bf16.mxu0 0
    %308 = vmatpush2.bf16.msra.mxu0 0
    %309 = vmatprep.subr.bf16.mxu0 0
    %310 = vmatpush2.bf16.msra.mxu0 0
    %311 = vmatprep.subr.bf16.mxu0 0
    %312 = vmatpush2.bf16.msra.mxu0 0
    %313 = vmatprep.mubr.bf16.mxu0 0
    %314 = vmatmul.mubr.bf16.gmra.mxu0 %v216
    %v315 = vpop.f32.mrf.mxu0
    %v316 = vadd.f32 0.0, %v315
    %v317 = vpop.f32.mrf.mxu0
    %v318 = vpop.f32.mrf.mxu0
    %v319 = vpop.f32.mrf.mxu0
    %320 = vdwg.mxu0
    %v321 = vpack.c.bf16 %v316, %v316
    %v323 = vsel %vm142, %v321, 0
    %325 = vmatprep.subr.bf16.mxu0 0
    %326 = vmatpush1.bf16.msra.mxu0 0
    %327 = vmatprep.subr.bf16.mxu0 0
    %328 = vmatpush1.bf16.msra.mxu0 0
    %329 = vmatprep.subr.bf16.mxu0 0
    %330 = vmatpush1.bf16.msra.mxu0 0
    %331 = vmatprep.subr.bf16.mxu0 0
    %332 = vmatpush1.bf16.msra.mxu0 0
    %333 = vmatprep.subr.bf16.mxu0 0
    %334 = vmatpush1.bf16.msra.mxu0 0
    %335 = vmatprep.subr.bf16.mxu0 0
    %336 = vmatpush1.bf16.msra.mxu0 0
    %337 = vmatprep.subr.bf16.mxu0 0
    %338 = vmatpush1.bf16.msra.mxu0 0
    %339 = vmatprep.subr.bf16.mxu0 0
    %340 = vmatpush1.bf16.msra.mxu0 %v323
    %341 = vmatprep.subr.bf16.mxu0 0
    %342 = vmatpush2.bf16.msra.mxu0 0
    %343 = vmatprep.subr.bf16.mxu0 0
    %344 = vmatpush2.bf16.msra.mxu0 0
    %345 = vmatprep.subr.bf16.mxu0 0
    %346 = vmatpush2.bf16.msra.mxu0 0
    %347 = vmatprep.subr.bf16.mxu0 0
    %348 = vmatpush2.bf16.msra.mxu0 0
    %349 = vmatprep.subr.bf16.mxu0 0
    %350 = vmatpush2.bf16.msra.mxu0 0
    %351 = vmatprep.subr.bf16.mxu0 0
    %352 = vmatpush2.bf16.msra.mxu0 0
    %353 = vmatprep.subr.bf16.mxu0 0
    %354 = vmatpush2.bf16.msra.mxu0 0
    %355 = vmatprep.subr.bf16.mxu0 0
    %356 = vmatpush2.bf16.msra.mxu0 0
    %357 = vmatprep.mubr.bf16.mxu0 0
    %358 = vmatmul.mubr.bf16.gmra.mxu0 %v140
    %v359 = vpop.f32.mrf.mxu0
    %v360 = vadd.f32 0.0, %v359
    %v361 = vpop.f32.mrf.mxu0
    %v362 = vpop.f32.mrf.mxu0
    %v363 = vpop.f32.mrf.mxu0
    %364 = vdwg.mxu0
    %vm365 = vcmp.gt.f32.partialorder %v360, 0.0
    %v366 = vmin.f32 %v360, 0.0
    %v367 = vmul.f32 %v366, 0.2
    %v368 = vmul.f32 %v367, 1.442695
    %v369 = vpow.pop %v368
    %v370 = vsub.f32 %v369, 1.0
    %v371 = vsel %vm365, %v360, %v370
    %v372 = vrot.slane %v371, 4
    %v373 = vadd.f32 %v371, %v372
    %v374 = vrot.slane %v373, 2
    %v375 = vadd.f32 %v373, %v374
    %v376 = vrot.slane %v375, 1
    %v377 = vadd.f32 %v375, %v376
    %v378 = vmul.f32 %v377, 0.125
    %v379 = vmul.f32 %v371, %v371
    %v380 = vrot.slane %v379, 4
    %v381 = vadd.f32 %v379, %v380
    %v382 = vrot.slane %v381, 2
    %v383 = vadd.f32 %v381, %v382
    %v384 = vrot.slane %v383, 1
    %v385 = vadd.f32 %v383, %v384
    %v386 = vmul.f32 %v385, 0.125
    %v387 = vmul.f32 %v378, %v378
    %v388 = vsub.f32 %v386, %v387
    %v389 = vmax.f32 %v388, 0.0
    %v390 = vsub.f32 %v371, %v378
    %v391 = vadd.f32 %v389, 1e-05
    %v392 = vrsqrt.pop %v391
    %v393 = vmul.f32 %v390, %v392
    %394 = vst [vmem:[#allocation4] sm:$0xff] %v393
    %v395 = vpack.c.bf16 %v393, %v393
    %v396 = vld [vmem:[%s4] sm:$0xf]
    %v397 = vld [vmem:[%s4 + $0x4] sm:$0xf]
    %v398 = vld [vmem:[%s4 + $0x8] sm:$0xf]
    %v399 = vld [vmem:[%s4 + $0xc] sm:$0xf]
    %v400 = vld [vmem:[%s4 + $0x10] sm:$0xf]
    %v401 = vld [vmem:[%s4 + $0x14] sm:$0xf]
    %v402 = vld [vmem:[%s4 + $0x18] sm:$0xf]
    %v403 = vld [vmem:[%s4 + $0x1c] sm:$0xf]
    %v404 = vld [vmem:[%s4 + $0x20] sm:$0xf]
    %v405 = vld [vmem:[%s4 + $0x24] sm:$0xf]
    %v406 = vld [vmem:[%s4 + $0x28] sm:$0xf]
    %v407 = vld [vmem:[%s4 + $0x2c] sm:$0xf]
    %v408 = vld [vmem:[%s4 + $0x30] sm:$0xf]
    %v409 = vld [vmem:[%s4 + $0x34] sm:$0xf]
    %v410 = vld [vmem:[%s4 + $0x38] sm:$0xf]
    %v411 = vld [vmem:[%s4 + $0x3c] sm:$0xf]
    %v428 = vunpack.c.l.b16 %v396
    %v429 = vunpack.c.l.b16 %v397
    %v430 = vunpack.c.l.b16 %v398
    %v431 = vunpack.c.l.b16 %v399
    %v432 = vunpack.c.l.b16 %v400
    %v433 = vunpack.c.l.b16 %v401
    %v434 = vunpack.c.l.b16 %v402
    %v435 = vunpack.c.l.b16 %v403
    %v436 = vunpack.c.l.b16 %v404
    %v437 = vunpack.c.l.b16 %v405
    %v438 = vunpack.c.l.b16 %v406
    %v439 = vunpack.c.l.b16 %v407
    %v440 = vunpack.c.l.b16 %v408
    %v441 = vunpack.c.l.b16 %v409
    %v442 = vunpack.c.l.b16 %v410
    %v443 = vunpack.c.l.b16 %v411
    %v444 = vpack.c.b16 %v429, %v428
    %v445 = vpack.c.b16 %v431, %v430
    %v446 = vpack.c.b16 %v433, %v432
    %v447 = vpack.c.b16 %v435, %v434
    %v448 = vpack.c.b16 %v437, %v436
    %v449 = vpack.c.b16 %v439, %v438
    %v450 = vpack.c.b16 %v441, %v440
    %v451 = vpack.c.b16 %v443, %v442
    %460 = vmatprep.subr.bf16.mxu0 0
    %461 = vmatpush1.bf16.msra.mxu0 %v451
    %462 = vmatprep.subr.bf16.mxu0 0
    %463 = vmatpush1.bf16.msra.mxu0 %v450
    %464 = vmatprep.subr.bf16.mxu0 0
    %465 = vmatpush1.bf16.msra.mxu0 %v449
    %466 = vmatprep.subr.bf16.mxu0 0
    %467 = vmatpush1.bf16.msra.mxu0 %v448
    %468 = vmatprep.subr.bf16.mxu0 0
    %469 = vmatpush1.bf16.msra.mxu0 %v447
    %470 = vmatprep.subr.bf16.mxu0 0
    %471 = vmatpush1.bf16.msra.mxu0 %v446
    %472 = vmatprep.subr.bf16.mxu0 0
    %473 = vmatpush1.bf16.msra.mxu0 %v445
    %474 = vmatprep.subr.bf16.mxu0 0
    %475 = vmatpush1.bf16.msra.mxu0 %v444
    %476 = vmatprep.subr.bf16.mxu0 0
    %477 = vmatpush2.bf16.msra.mxu0 0
    %478 = vmatprep.subr.bf16.mxu0 0
    %479 = vmatpush2.bf16.msra.mxu0 0
    %480 = vmatprep.subr.bf16.mxu0 0
    %481 = vmatpush2.bf16.msra.mxu0 0
    %482 = vmatprep.subr.bf16.mxu0 0
    %483 = vmatpush2.bf16.msra.mxu0 0
    %484 = vmatprep.subr.bf16.mxu0 0
    %485 = vmatpush2.bf16.msra.mxu0 0
    %486 = vmatprep.subr.bf16.mxu0 0
    %487 = vmatpush2.bf16.msra.mxu0 0
    %488 = vmatprep.subr.bf16.mxu0 0
    %489 = vmatpush2.bf16.msra.mxu0 0
    %490 = vmatprep.subr.bf16.mxu0 0
    %491 = vmatpush2.bf16.msra.mxu0 0
    %492 = vmatprep.mubr.bf16.mxu0 0
    %493 = vmatmul.mubr.bf16.gmra.mxu0 %v395
    %v494 = vpop.f32.mrf.mxu0
    %v495 = vadd.f32 0.0, %v494
    %v496 = vpop.f32.mrf.mxu0
    %v497 = vpop.f32.mrf.mxu0
    %v498 = vpop.f32.mrf.mxu0
    %499 = vdwg.mxu0
    %v500 = vpack.c.bf16 %v495, %v495
    %v502 = vsel %vm142, %v500, 0
    %504 = vmatprep.subr.bf16.mxu0 0
    %505 = vmatpush1.bf16.msra.mxu0 0
    %506 = vmatprep.subr.bf16.mxu0 0
    %507 = vmatpush1.bf16.msra.mxu0 0
    %508 = vmatprep.subr.bf16.mxu0 0
    %509 = vmatpush1.bf16.msra.mxu0 0
    %510 = vmatprep.subr.bf16.mxu0 0
    %511 = vmatpush1.bf16.msra.mxu0 0
    %512 = vmatprep.subr.bf16.mxu0 0
    %513 = vmatpush1.bf16.msra.mxu0 0
    %514 = vmatprep.subr.bf16.mxu0 0
    %515 = vmatpush1.bf16.msra.mxu0 0
    %516 = vmatprep.subr.bf16.mxu0 0
    %517 = vmatpush1.bf16.msra.mxu0 0
    %518 = vmatprep.subr.bf16.mxu0 0
    %519 = vmatpush1.bf16.msra.mxu0 %v502
    %520 = vmatprep.subr.bf16.mxu0 0
    %521 = vmatpush2.bf16.msra.mxu0 0
    %522 = vmatprep.subr.bf16.mxu0 0
    %523 = vmatpush2.bf16.msra.mxu0 0
    %524 = vmatprep.subr.bf16.mxu0 0
    %525 = vmatpush2.bf16.msra.mxu0 0
    %526 = vmatprep.subr.bf16.mxu0 0
    %527 = vmatpush2.bf16.msra.mxu0 0
    %528 = vmatprep.subr.bf16.mxu0 0
    %529 = vmatpush2.bf16.msra.mxu0 0
    %530 = vmatprep.subr.bf16.mxu0 0
    %531 = vmatpush2.bf16.msra.mxu0 0
    %532 = vmatprep.subr.bf16.mxu0 0
    %533 = vmatpush2.bf16.msra.mxu0 0
    %534 = vmatprep.subr.bf16.mxu0 0
    %535 = vmatpush2.bf16.msra.mxu0 0
    %536 = vmatprep.mubr.bf16.mxu0 0
    %537 = vmatmul.mubr.bf16.gmra.mxu0 %v140
    %v538 = vpop.f32.mrf.mxu0
    %v539 = vadd.f32 0.0, %v538
    %v540 = vpop.f32.mrf.mxu0
    %v541 = vpop.f32.mrf.mxu0
    %v542 = vpop.f32.mrf.mxu0
    %543 = vdwg.mxu0
    %vm544 = vcmp.gt.f32.partialorder %v539, 0.0
    %v545 = vmin.f32 %v539, 0.0
    %v546 = vmul.f32 %v545, 0.2
    %v547 = vmul.f32 %v546, 1.442695
    %v548 = vpow.pop %v547
    %v549 = vsub.f32 %v548, 1.0
    %v550 = vsel %vm544, %v539, %v549
    %v551 = vrot.slane %v550, 4
    %v552 = vadd.f32 %v550, %v551
    %v553 = vrot.slane %v552, 2
    %v554 = vadd.f32 %v552, %v553
    %v555 = vrot.slane %v554, 1
    %v556 = vadd.f32 %v554, %v555
    %v557 = vmul.f32 %v556, 0.125
    %v558 = vmul.f32 %v550, %v550
    %v559 = vrot.slane %v558, 4
    %v560 = vadd.f32 %v558, %v559
    %v561 = vrot.slane %v560, 2
    %v562 = vadd.f32 %v560, %v561
    %v563 = vrot.slane %v562, 1
    %v564 = vadd.f32 %v562, %v563
    %v565 = vmul.f32 %v564, 0.125
    %v566 = vmul.f32 %v557, %v557
    %v567 = vsub.f32 %v565, %v566
    %v568 = vmax.f32 %v567, 0.0
    %v569 = vsub.f32 %v550, %v557
    %v570 = vadd.f32 %v568, 1e-05
    %v571 = vrsqrt.pop %v570
    %v572 = vmul.f32 %v569, %v571
    %573 = vst [vmem:[#allocation6] sm:$0xff] %v572
    %v574 = vpack.c.bf16 %v572, %v572
    %v575 = vld [vmem:[%s5] sm:$0xf]
    %v576 = vld [vmem:[%s5 + $0x4] sm:$0xf]
    %v577 = vld [vmem:[%s5 + $0x8] sm:$0xf]
    %v578 = vld [vmem:[%s5 + $0xc] sm:$0xf]
    %v579 = vld [vmem:[%s5 + $0x10] sm:$0xf]
    %v580 = vld [vmem:[%s5 + $0x14] sm:$0xf]
    %v581 = vld [vmem:[%s5 + $0x18] sm:$0xf]
    %v582 = vld [vmem:[%s5 + $0x1c] sm:$0xf]
    %v583 = vld [vmem:[%s5 + $0x20] sm:$0xf]
    %v584 = vld [vmem:[%s5 + $0x24] sm:$0xf]
    %v585 = vld [vmem:[%s5 + $0x28] sm:$0xf]
    %v586 = vld [vmem:[%s5 + $0x2c] sm:$0xf]
    %v587 = vld [vmem:[%s5 + $0x30] sm:$0xf]
    %v588 = vld [vmem:[%s5 + $0x34] sm:$0xf]
    %v589 = vld [vmem:[%s5 + $0x38] sm:$0xf]
    %v590 = vld [vmem:[%s5 + $0x3c] sm:$0xf]
    %v607 = vunpack.c.l.b16 %v575
    %v608 = vunpack.c.l.b16 %v576
    %v609 = vunpack.c.l.b16 %v577
    %v610 = vunpack.c.l.b16 %v578
    %v611 = vunpack.c.l.b16 %v579
    %v612 = vunpack.c.l.b16 %v580
    %v613 = vunpack.c.l.b16 %v581
    %v614 = vunpack.c.l.b16 %v582
    %v615 = vunpack.c.l.b16 %v583
    %v616 = vunpack.c.l.b16 %v584
    %v617 = vunpack.c.l.b16 %v585
    %v618 = vunpack.c.l.b16 %v586
    %v619 = vunpack.c.l.b16 %v587
    %v620 = vunpack.c.l.b16 %v588
    %v621 = vunpack.c.l.b16 %v589
    %v622 = vunpack.c.l.b16 %v590
    %v623 = vpack.c.b16 %v608, %v607
    %v624 = vpack.c.b16 %v610, %v609
    %v625 = vpack.c.b16 %v612, %v611
    %v626 = vpack.c.b16 %v614, %v613
    %v627 = vpack.c.b16 %v616, %v615
    %v628 = vpack.c.b16 %v618, %v617
    %v629 = vpack.c.b16 %v620, %v619
    %v630 = vpack.c.b16 %v622, %v621
    %639 = vmatprep.subr.bf16.mxu0 0
    %640 = vmatpush1.bf16.msra.mxu0 %v630
    %641 = vmatprep.subr.bf16.mxu0 0
    %642 = vmatpush1.bf16.msra.mxu0 %v629
    %643 = vmatprep.subr.bf16.mxu0 0
    %644 = vmatpush1.bf16.msra.mxu0 %v628
    %645 = vmatprep.subr.bf16.mxu0 0
    %646 = vmatpush1.bf16.msra.mxu0 %v627
    %647 = vmatprep.subr.bf16.mxu0 0
    %648 = vmatpush1.bf16.msra.mxu0 %v626
    %649 = vmatprep.subr.bf16.mxu0 0
    %650 = vmatpush1.bf16.msra.mxu0 %v625
    %651 = vmatprep.subr.bf16.mxu0 0
    %652 = vmatpush1.bf16.msra.mxu0 %v624
    %653 = vmatprep.subr.bf16.mxu0 0
    %654 = vmatpush1.bf16.msra.mxu0 %v623
    %655 = vmatprep.subr.bf16.mxu0 0
    %656 = vmatpush2.bf16.msra.mxu0 0
    %657 = vmatprep.subr.bf16.mxu0 0
    %658 = vmatpush2.bf16.msra.mxu0 0
    %659 = vmatprep.subr.bf16.mxu0 0
    %660 = vmatpush2.bf16.msra.mxu0 0
    %661 = vmatprep.subr.bf16.mxu0 0
    %662 = vmatpush2.bf16.msra.mxu0 0
    %663 = vmatprep.subr.bf16.mxu0 0
    %664 = vmatpush2.bf16.msra.mxu0 0
    %665 = vmatprep.subr.bf16.mxu0 0
    %666 = vmatpush2.bf16.msra.mxu0 0
    %667 = vmatprep.subr.bf16.mxu0 0
    %668 = vmatpush2.bf16.msra.mxu0 0
    %669 = vmatprep.subr.bf16.mxu0 0
    %670 = vmatpush2.bf16.msra.mxu0 0
    %671 = vmatprep.mubr.bf16.mxu0 0
    %672 = vmatmul.mubr.bf16.gmra.mxu0 %v574
    %v673 = vpop.f32.mrf.mxu0
    %v674 = vadd.f32 0.0, %v673
    %v675 = vpop.f32.mrf.mxu0
    %v676 = vpop.f32.mrf.mxu0
    %v677 = vpop.f32.mrf.mxu0
    %678 = vdwg.mxu0
    %v679 = vpack.c.bf16 %v674, %v674
    %v681 = vsel %vm142, %v679, 0
    %683 = vmatprep.subr.bf16.mxu0 0
    %684 = vmatpush1.bf16.msra.mxu0 0
    %685 = vmatprep.subr.bf16.mxu0 0
    %686 = vmatpush1.bf16.msra.mxu0 0
    %687 = vmatprep.subr.bf16.mxu0 0
    %688 = vmatpush1.bf16.msra.mxu0 0
    %689 = vmatprep.subr.bf16.mxu0 0
    %690 = vmatpush1.bf16.msra.mxu0 0
    %691 = vmatprep.subr.bf16.mxu0 0
    %692 = vmatpush1.bf16.msra.mxu0 0
    %693 = vmatprep.subr.bf16.mxu0 0
    %694 = vmatpush1.bf16.msra.mxu0 0
    %695 = vmatprep.subr.bf16.mxu0 0
    %696 = vmatpush1.bf16.msra.mxu0 0
    %697 = vmatprep.subr.bf16.mxu0 0
    %698 = vmatpush1.bf16.msra.mxu0 %v681
    %699 = vmatprep.subr.bf16.mxu0 0
    %700 = vmatpush2.bf16.msra.mxu0 0
    %701 = vmatprep.subr.bf16.mxu0 0
    %702 = vmatpush2.bf16.msra.mxu0 0
    %703 = vmatprep.subr.bf16.mxu0 0
    %704 = vmatpush2.bf16.msra.mxu0 0
    %705 = vmatprep.subr.bf16.mxu0 0
    %706 = vmatpush2.bf16.msra.mxu0 0
    %707 = vmatprep.subr.bf16.mxu0 0
    %708 = vmatpush2.bf16.msra.mxu0 0
    %709 = vmatprep.subr.bf16.mxu0 0
    %710 = vmatpush2.bf16.msra.mxu0 0
    %711 = vmatprep.subr.bf16.mxu0 0
    %712 = vmatpush2.bf16.msra.mxu0 0
    %713 = vmatprep.subr.bf16.mxu0 0
    %714 = vmatpush2.bf16.msra.mxu0 0
    %715 = vmatprep.mubr.bf16.mxu0 0
    %716 = vmatmul.mubr.bf16.gmra.mxu0 %v140
    %v717 = vpop.f32.mrf.mxu0
    %v718 = vadd.f32 0.0, %v717
    %v719 = vpop.f32.mrf.mxu0
    %v720 = vpop.f32.mrf.mxu0
    %v721 = vpop.f32.mrf.mxu0
    %722 = vdwg.mxu0
    %vm723 = vcmp.gt.f32.partialorder %v718, 0.0
    %v724 = vmin.f32 %v718, 0.0
    %v725 = vmul.f32 %v724, 0.2
    %v726 = vmul.f32 %v725, 1.442695
    %v727 = vpow.pop %v726
    %v728 = vsub.f32 %v727, 1.0
    %v729 = vsel %vm723, %v718, %v728
    %v730 = vrot.slane %v729, 4
    %v731 = vadd.f32 %v729, %v730
    %v732 = vrot.slane %v731, 2
    %v733 = vadd.f32 %v731, %v732
    %v734 = vrot.slane %v733, 1
    %v735 = vadd.f32 %v733, %v734
    %v736 = vmul.f32 %v735, 0.125
    %v737 = vmul.f32 %v729, %v729
    %v738 = vrot.slane %v737, 4
    %v739 = vadd.f32 %v737, %v738
    %v740 = vrot.slane %v739, 2
    %v741 = vadd.f32 %v739, %v740
    %v742 = vrot.slane %v741, 1
    %v743 = vadd.f32 %v741, %v742
    %v744 = vmul.f32 %v743, 0.125
    %v745 = vmul.f32 %v736, %v736
    %v746 = vsub.f32 %v744, %v745
    %v747 = vmax.f32 %v746, 0.0
    %v748 = vsub.f32 %v729, %v736
    %v749 = vadd.f32 %v747, 1e-05
    %v750 = vrsqrt.pop %v749
    %v751 = vmul.f32 %v748, %v750
    %752 = vst [vmem:[#allocation7] sm:$0xff] %v751
    // Predicated region
    $region26: #{fea_forward.1} parent=1 // pred_check
      _
    $region27: #{fea_forward.1} parent=1 // pred_check_branch
      %754 = sbr.rel (0) target = $region29
    $region28: #{fea_forward.1} parent=1 // pred_region
      %s756 = ssub.s32 128, 128
      %757 = vsyncadd [#allocation3], %s756
      %s759 = sshll.u32 [#allocation2], 4
      %s760 = int_to_ptr.vmem [resolvable:$true] %s759
      %762 = dma.vmem_to_hbm [thread:$0]  %s760, 128, %s6, [#allocation3]
    $region29: #{fea_forward.1} parent=1 // pred_fallthru
      _
    // Predicated region
    $region30: #{fea_forward.1} parent=1 // pred_check
      _
    $region31: #{fea_forward.1} parent=1 // pred_check_branch
      %764 = sbr.rel (0) target = $region33
    $region32: #{fea_forward.1} parent=1 // pred_region
      %s766 = ssub.s32 128, 128
      %767 = vsyncadd [#allocation5], %s766
      %s769 = sshll.u32 [#allocation4], 4
      %s770 = int_to_ptr.vmem [resolvable:$true] %s769
      %772 = dma.vmem_to_hbm [thread:$0]  %s770, 128, %s7, [#allocation5]
    $region33: #{fea_forward.1} parent=1 // pred_fallthru
      _
    // Predicated region
    $region34: #{fea_forward.1} parent=1 // pred_check
      _
    $region35: #{fea_forward.1} parent=1 // pred_check_branch
      %774 = sbr.rel (0) target = $region37
    $region36: #{fea_forward.1} parent=1 // pred_region
      %s776 = ssub.s32 128, 128
      %777 = vsyncadd [#allocation5], %s776
      %s779 = sshll.u32 [#allocation6], 4
      %s780 = int_to_ptr.vmem [resolvable:$true] %s779
      %782 = dma.vmem_to_hbm [thread:$0]  %s780, 128, %s8, [#allocation5]
    $region37: #{fea_forward.1} parent=1 // pred_fallthru
      _
    // Predicated region
    $region38: #{fea_forward.1} parent=1 // pred_check
      _
    $region39: #{fea_forward.1} parent=1 // pred_check_branch
      %784 = sbr.rel (0) target = $region41
    $region40: #{fea_forward.1} parent=1 // pred_region
      %s786 = ssub.s32 128, 128
      %787 = vsyncadd [#allocation8], %s786
      %s789 = sshll.u32 [#allocation7], 4
      %s790 = int_to_ptr.vmem [resolvable:$true] %s789
      %792 = dma.vmem_to_hbm [thread:$0]  %s790, 128, %s9, [#allocation8]
    $region41: #{fea_forward.1} parent=1 // pred_fallthru
      _
    // Predicated region
    $region42: #{fea_forward.1} parent=1 // pred_check
      _
    $region43: #{fea_forward.1} parent=1 // pred_check_branch
      %794 = sbr.rel (0) target = $region45
    $region44: #{fea_forward.1} parent=1 // pred_region
      %795 = dma.done [#allocation3], 128
    $region45: #{fea_forward.1} parent=1 // pred_fallthru
      _
    // Predicated region
    $region46: #{fea_forward.1} parent=1 // pred_check
      _
    $region47: #{fea_forward.1} parent=1 // pred_check_branch
      %797 = sbr.rel (0) target = $region49
    $region48: #{fea_forward.1} parent=1 // pred_region
      %798 = dma.done [#allocation5], 128
    $region49: #{fea_forward.1} parent=1 // pred_fallthru
      _
    // Predicated region
    $region50: #{fea_forward.1} parent=1 // pred_check
      _
    $region51: #{fea_forward.1} parent=1 // pred_check_branch
      %800 = sbr.rel (0) target = $region53
    $region52: #{fea_forward.1} parent=1 // pred_region
      %801 = dma.done [#allocation5], 128
    $region53: #{fea_forward.1} parent=1 // pred_fallthru
      _
    // Predicated region
    $region54: #{fea_forward.1} parent=1 // pred_check
      _
    $region55: #{fea_forward.1} parent=1 // pred_check_branch
      %803 = sbr.rel (0) target = $region57
    $region56: #{fea_forward.1} parent=1 // pred_region
      %804 = dma.done [#allocation8], 128
    $region57: #{fea_forward.1} parent=1 // pred_fallthru
      _
    %805 = vsyncpa [#allocation3], 1
    %806 = vsyncpa [#allocation5], 1
    %807 = vsyncpa [#allocation8], 1

</llo_original>
